<compile_context>
chip_gen: v7x
topology: tpu7x:2x2x1
jax: 0.10.0
libtpu: 0.0.40
codegen_flags: <defaults>
</compile_context>

<pallas_src>
import math

import jax
import jax.numpy as jnp
from jax.experimental import pallas as pl
from jax.experimental.pallas import tpu as pltpu


def _round_up(x, m):
    return ((x + m - 1) // m) * m


_VMEM_LIMIT = 32 * 1024 * 1024   # == v6e/v7x defaults, raises v5e's 16 MiB


def _td_dense_kernel(d_ref, wt_ref, b_ref, o_ref):
    # d_ref : (TB, In)   streamed row tile
    # wt_ref: (In, Out)  weight-stationary, pre-transposed (MXU RHS = (K, N))
    # b_ref : (1, Out)
    # o_ref : (TB, Out)  unpadded Out -> no zero columns in the HBM writeback
    acc = jnp.dot(d_ref[...], wt_ref[...], preferred_element_type=jnp.float32)
    gamma = jnp.maximum(acc + b_ref[...].astype(jnp.float32), 0.0)   # relu
    o_ref[...] = jnp.exp(-gamma).astype(o_ref.dtype)


def _td_diag_kernel(d_ref, w_ref, b_ref, o_ref):
    # Elementwise: F.linear(d, W*eye, b)[i, j] == d[i, j] * W[j, j] + b[j]
    x = d_ref[...].astype(jnp.float32) * w_ref[...].astype(jnp.float32)
    gamma = jnp.maximum(x + b_ref[...].astype(jnp.float32), 0.0)
    o_ref[...] = jnp.exp(-gamma).astype(o_ref.dtype)


def _row_tiling(rows, row_tile):
    """Pick a row-tile size and grid length.

    No wrapper-side padding: the grid is cdiv(rows, tb) and Pallas masks the
    partial final block. For medium row counts the work is split into >= 2
    tiles so both v7x TensorCores get a share of the 'parallel' axis.
    """
    row_tile = max(8, _round_up(row_tile, 8))
    if rows > row_tile:
        tb = row_tile                              # many tiles, tb % 8 == 0
    elif rows >= 16:
        tb = _round_up(pl.cdiv(rows, 2), 8)        # at least 2 tiles
    else:
        tb = rows                                  # block == full dim (legal)
    return tb, pl.cdiv(rows, tb)


def temporal_decay(d, W, b, diag=False, row_tile=4096):
    """gamma = exp(-relu(d @ (W*[eye])^T + b)).

    d: (..., In) float32   (leading dims are flattened into one row slab)
    W: (Out, In) float32
    b: (Out,)    float32
    returns (..., Out) float32
    """
    Out, In = W.shape
    lead = d.shape[:-1]
    assert d.shape[-1] == In
    rows = 1
    for s in lead:
        rows *= s
    d2 = d.reshape(rows, In)

    cparams = pltpu.CompilerParams(
        dimension_semantics=("parallel",),
        vmem_limit_bytes=_VMEM_LIMIT)

    if diag:
        assert In == Out
        w_diag = jnp.diagonal(W)
        # Lane-densify: fold groups of rows into the lane axis so streamed
        # blocks are 128 lanes wide. Row-major contiguous reshape -> free.
        fold = (128 // In) if (In <= 128 and 128 % In == 0) else 1
        if fold > 1 and rows >= fold and rows % fold == 0:
            d2 = d2.reshape(rows // fold, In * fold)
            w_row = jnp.tile(w_diag, fold).reshape(1, In * fold)
            b_row = jnp.tile(b, fold).reshape(1, In * fold)
        else:
            w_row = w_diag.reshape(1, In)
            b_row = b.reshape(1, In)
        r_eff, c_eff = d2.shape
        tb, n_tiles = _row_tiling(r_eff, row_tile)

        out = pl.pallas_call(
            _td_diag_kernel,
            out_shape=jax.ShapeDtypeStruct((r_eff, c_eff), d.dtype),
            grid_spec=pltpu.PrefetchScalarGridSpec(
                num_scalar_prefetch=0,
                grid=(n_tiles,),
                in_specs=[
                    pl.BlockSpec((tb, c_eff), lambda i: (i, 0)),  # streamed rows
                    pl.BlockSpec((1, c_eff), lambda i: (0, 0)),   # diag(W), tiled
                    pl.BlockSpec((1, c_eff), lambda i: (0, 0)),   # bias, tiled
                ],
                out_specs=pl.BlockSpec((tb, c_eff), lambda i: (i, 0)),
            ),
            compiler_params=cparams,
        )(d2, w_row, b_row)
        return out.reshape(*lead, Out)

    # Dense path: weight-stationary pre-transposed W, unpadded Out.
    W_t = W.T                        # (In, Out) — tiny one-time transpose
    b2 = b.reshape(1, Out)
    tb, n_tiles = _row_tiling(rows, row_tile)

    out = pl.pallas_call(
        _td_dense_kernel,
        out_shape=jax.ShapeDtypeStruct((rows, Out), d.dtype),
        grid_spec=pltpu.PrefetchScalarGridSpec(
            num_scalar_prefetch=0,
            grid=(n_tiles,),
            in_specs=[
                pl.BlockSpec((tb, In), lambda i: (i, 0)),     # streamed rows
                pl.BlockSpec((In, Out), lambda i: (0, 0)),    # weight-stationary
                pl.BlockSpec((1, Out), lambda i: (0, 0)),     # bias
            ],
            out_specs=pl.BlockSpec((tb, Out), lambda i: (i, 0)),
        ),
        compiler_params=cparams,
    )(d2, W_t, b2)
    return out.reshape(*lead, Out)


def _reference(d, W, b, diag=False):
    if diag:
        W = W * jnp.eye(W.shape[0], dtype=W.dtype)
    g = jnp.maximum(jnp.matmul(d, W.T) + b, 0.0)
    return jnp.exp(-g)


if __name__ == "__main__":
    key = jax.random.PRNGKey(0)

    # Small BRITS-like shapes.
    batch, input_size = 8, 32
    out_h = 48        # dense (non-square) head
    out_x = 32        # diag head requires In == Out
    T = 16            # timesteps -> (T*B, In) slab in one pallas_call

    kWh, kbh, kWx, kbx, kd, kds, kodd = jax.random.split(key, 7)

    # Deterministic init mirroring reset_parameters(): uniform(-stdv, stdv),
    # stdv = 1/sqrt(output_size).
    stdv_h = 1.0 / math.sqrt(out_h)
    W_h = jax.random.uniform(kWh, (out_h, input_size), jnp.float32,
                             minval=-stdv_h, maxval=stdv_h)
    b_h = jax.random.uniform(kbh, (out_h,), jnp.float32,
                             minval=-stdv_h, maxval=stdv_h)

    stdv_x = 1.0 / math.sqrt(out_x)
    W_x = jax.random.uniform(kWx, (out_x, input_size), jnp.float32,
                             minval=-stdv_x, maxval=stdv_x)
    b_x = jax.random.uniform(kbx, (out_x,), jnp.float32,
                             minval=-stdv_x, maxval=stdv_x)

    d = jax.random.uniform(kd, (batch, input_size), jnp.float32,
                           minval=0.0, maxval=5.0)
    d_slab = jax.random.uniform(kds, (T, batch, input_size), jnp.float32,
                                minval=0.0, maxval=5.0)
    # Awkward row count (63 rows) -> exercises the masked partial final block.
    d_odd = jax.random.uniform(kodd, (7, 9, input_size), jnp.float32,
                               minval=0.0, maxval=5.0)

    # diag=False (temp_decay_h), single timestep.
    out_full = jax.block_until_ready(temporal_decay(d, W_h, b_h, diag=False))
    ref_full = _reference(d, W_h, b_h, diag=False)

    # diag=True (temp_decay_x), elementwise lane-densified path.
    out_diag = jax.block_until_ready(temporal_decay(d, W_x, b_x, diag=True))
    ref_diag = _reference(d, W_x, b_x, diag=True)

    # Batched (T, B, In) slab in a single pallas_call (2 row tiles).
    out_slab = jax.block_until_ready(temporal_decay(d_slab, W_h, b_h, diag=False))
    ref_slab = _reference(d_slab, W_h, b_h, diag=False)

    # Non-divisible row count (partial final block, no wrapper padding).
    out_odd = jax.block_until_ready(temporal_decay(d_odd, W_h, b_h, diag=False))
    ref_odd = _reference(d_odd, W_h, b_h, diag=False)

    assert out_full.shape == (batch, out_h)
    assert out_diag.shape == (batch, out_x)
    assert out_slab.shape == (T, batch, out_h)
    assert out_odd.shape == (7, 9, out_h)
    assert jnp.allclose(out_full, ref_full, atol=1e-5, rtol=1e-5)
    assert jnp.allclose(out_diag, ref_diag, atol=1e-5, rtol=1e-5)
    assert jnp.allclose(out_slab, ref_slab, atol=1e-5, rtol=1e-5)
    assert jnp.allclose(out_odd, ref_odd, atol=1e-5, rtol=1e-5)

    print("KERNEL_OK")
</pallas_src>

<mosaic_0001>
module attributes {stable_mosaic.version = 11 : i64} {
  func.func @_td_dense_kernel(%arg0: i32, %arg1: memref<8x32xf32, #tpu.memory_space<vmem>>, %arg2: memref<32x48xf32, #tpu.memory_space<vmem>>, %arg3: memref<1x48xf32, #tpu.memory_space<vmem>>, %arg4: memref<8x48xf32, #tpu.memory_space<vmem>>) attributes {dimension_semantics = [#tpu.dimension_semantics<parallel>], iteration_bounds = array<i64: 1>, scalar_prefetch = 0 : i64, scratch_operands = 0 : i64, tpu.core_type = #tpu.core_type<tc>, window_params = [{transform_indices = @transform_0, window_bounds = array<i64: 8, 32>}, {pipeline_mode = #tpu.pipeline_mode<synchronous>, transform_indices = @transform_1, window_bounds = array<i64: 32, 48>}, {pipeline_mode = #tpu.pipeline_mode<synchronous>, transform_indices = @transform_2, window_bounds = array<i64: 1, 48>}, {transform_indices = @transform_3, window_bounds = array<i64: 8, 48>}]} {
    %c0 = arith.constant 0 : index
    %c0_0 = arith.constant 0 : index
    %0 = vector.load %arg1[%c0, %c0_0] : memref<8x32xf32, #tpu.memory_space<vmem>>, vector<8x32xf32>
    %c0_1 = arith.constant 0 : index
    %c0_2 = arith.constant 0 : index
    %1 = vector.load %arg2[%c0_1, %c0_2] : memref<32x48xf32, #tpu.memory_space<vmem>>, vector<32x48xf32>
    %cst = arith.constant dense<0.000000e+00> : vector<8x48xf32>
    %2 = tpu.matmul %0, %1, %cst {dimension_numbers = #tpu.dot_dimension_numbers<[1], [0], [0], [1], [0, 0, 1, 1], [], []>} : vector<8x32xf32>, vector<32x48xf32>, vector<8x48xf32> -> vector<8x48xf32>
    %c0_3 = arith.constant 0 : index
    %c0_4 = arith.constant 0 : index
    %3 = vector.load %arg3[%c0_3, %c0_4] : memref<1x48xf32, #tpu.memory_space<vmem>>, vector<1x48xf32>
    %4 = vector.broadcast %3 : vector<1x48xf32> to vector<8x48xf32>
    %5 = arith.addf %2, %4 : vector<8x48xf32>
    %cst_5 = arith.constant 0.000000e+00 : f32
    %6 = vector.broadcast %cst_5 : f32 to vector<8x48xf32>
    %7 = arith.maximumf %5, %6 : vector<8x48xf32>
    %cst_6 = arith.constant 0.000000e+00 : f32
    %8 = vector.broadcast %cst_6 : f32 to vector<8x48xf32>
    %9 = arith.subf %8, %7 : vector<8x48xf32>
    %10 = math.exp %9 : vector<8x48xf32>
    %c0_7 = arith.constant 0 : index
    %c0_8 = arith.constant 0 : index
    %11 = vector.load %arg4[%c0_7, %c0_8] : memref<8x48xf32, #tpu.memory_space<vmem>>, vector<8x48xf32>
    tpu.vector_store %arg4[%c0_7, %c0_8], %10 {strides = array<i32>} : memref<8x48xf32, #tpu.memory_space<vmem>>, vector<8x48xf32>,
    return
  }
  func.func @transform_0(%arg0: i32) -> (i32, i32) {
    %c0_i32 = arith.constant 0 : i32
    %c0_i32_0 = arith.constant 0 : i32
    return %arg0, %c0_i32 : i32, i32
  }
  func.func @transform_1(%arg0: i32) -> (i32, i32) {
    %c0_i32 = arith.constant 0 : i32
    %c0_i32_0 = arith.constant 0 : i32
    %c0_i32_1 = arith.constant 0 : i32
    return %c0_i32, %c0_i32_0 : i32, i32
  }
  func.func @transform_2(%arg0: i32) -> (i32, i32) {
    %c0_i32 = arith.constant 0 : i32
    %c0_i32_0 = arith.constant 0 : i32
    %c0_i32_1 = arith.constant 0 : i32
    return %c0_i32, %c0_i32_0 : i32, i32
  }
  func.func @transform_3(%arg0: i32) -> (i32, i32) {
    %c0_i32 = arith.constant 0 : i32
    %c0_i32_0 = arith.constant 0 : i32
    return %arg0, %c0_i32 : i32, i32
  }
}

</mosaic_0001>

<llo_original>
// kernel: tpu_custom_call.1
$region0: #{tpu_custom_call.1}
  #allocation0 [shape = 'u32[]', space=smem, size = 0x4, offset = 0x4, fixed_abs, tag = 'smem constant byte address 0x4 - core index']
  #allocation1 [shape = 'u32[144,128]{1,0:T(1,128)}', space=vmem, size = 0x12000, scoped, tag = 'internal scratch']
  %s0 = inlined_call_operand.hbm [shape: f32[8,32], index: 0, kind: input, shape index: {}]
  %s1 = inlined_call_operand.hbm [shape: f32[32,48], index: 1, kind: input, shape index: {}]
  %s2 = inlined_call_operand.vmem [shape: f32[1,48], index: 2, kind: input, shape index: {}]
  %s3 = inlined_call_operand.hbm [shape: f32[8,48], index: 3, kind: output, shape index: {}]
  %s4 = sld [smem:[#allocation0]]
  $region30: #{tpu_custom_call.1} parent=0
    _
  %s6 = ssub.s32 1, %s4
  %s7 = scalar_select 0, %s6, %s4
  $region1: #{tpu_custom_call.1} parent=0
    #allocation2 [shape = 'u8[4096]{0}', space=vmem, size = 0x1000, scoped, tag = 'input window, operand 0, single buffered']
    #allocation3 [shape = 's32[1]{0}', space=sflag, size = 0x4, scoped, tag = 'scoped memory for tpu_custom_call.1']
    #allocation4 [shape = 's32[1]{0}', space=sflag, size = 0x4, scoped, tag = 'scoped memory for tpu_custom_call.1']
    #allocation5 [shape = 'u8[16384]{0}', space=vmem, size = 0x4000, scoped, tag = 'input window, operand 1, single buffered']
    #allocation6 [shape = 's32[1]{0}', space=sflag, size = 0x4, scoped, tag = 'scoped memory for tpu_custom_call.1']
    #allocation7 [shape = 'u8[4096]{0}', space=vmem, size = 0x1000, scoped, tag = 'output window, operand 0, single buffered']
    %8 = vsyncpa [#allocation3], 0
    %9 = vsyncpa [#allocation6], 0
    %10 = vsyncpa [#allocation4], 0
    // Predicated region
    $region2: #{tpu_custom_call.1} parent=1 // pred_check
      _
    $region3: #{tpu_custom_call.1} parent=1 // pred_check_branch
      %12 = sbr.rel (0) target = $region5
    $region4: #{tpu_custom_call.1} parent=1 // pred_region
      %s14 = ssub.s32 128, 128
      %15 = vsyncadd [#allocation3], %s14
      %s17 = sshll.u32 [#allocation2], 4
      %s18 = int_to_ptr.vmem [resolvable:$true] %s17
      %20 = dma.hbm_to_vmem [thread:$0]  %s0, 128, %s18, [#allocation3]
    $region5: #{tpu_custom_call.1} parent=1 // pred_fallthru
      _
    // Predicated region
    $region6: #{tpu_custom_call.1} parent=1 // pred_check
      _
    $region7: #{tpu_custom_call.1} parent=1 // pred_check_branch
      %22 = sbr.rel (0) target = $region9
    $region8: #{tpu_custom_call.1} parent=1 // pred_region
      %s24 = ssub.s32 512, 512
      %25 = vsyncadd [#allocation6], %s24
      %s26 = sshll.u32 [#allocation5], 4
      %s27 = int_to_ptr.vmem [resolvable:$true] %s26
      %32 = dma.hbm_to_vmem [thread:$0]  %s1, 512, %s27, [#allocation6], 128, 128, 8
    $region9: #{tpu_custom_call.1} parent=1 // pred_fallthru
      _
    // Predicated region
    $region10: #{tpu_custom_call.1} parent=1 // pred_check
      _
    $region11: #{tpu_custom_call.1} parent=1 // pred_check_branch
      %34 = sbr.rel (0) target = $region13
    $region12: #{tpu_custom_call.1} parent=1 // pred_region
      _
    $region13: #{tpu_custom_call.1} parent=1 // pred_fallthru
      _
    // Predicated region
    $region14: #{tpu_custom_call.1} parent=1 // pred_check
      _
    $region15: #{tpu_custom_call.1} parent=1 // pred_check_branch
      %36 = sbr.rel (0) target = $region17
    $region16: #{tpu_custom_call.1} parent=1 // pred_region
      %37 = dma.done [#allocation3], 128
    $region17: #{tpu_custom_call.1} parent=1 // pred_fallthru
      _
    // Predicated region
    $region18: #{tpu_custom_call.1} parent=1 // pred_check
      _
    $region19: #{tpu_custom_call.1} parent=1 // pred_check_branch
      %39 = sbr.rel (0) target = $region21
    $region20: #{tpu_custom_call.1} parent=1 // pred_region
      %40 = dma.done [#allocation6], 512
    $region21: #{tpu_custom_call.1} parent=1 // pred_fallthru
      _
    %v41 = vld [vmem:[#allocation2] sm:$0xff]
    %v42 = vld [vmem:[#allocation5] sm:$0xff]
    %v43 = vld [vmem:[#allocation5 + $0x8] sm:$0xff]
    %v44 = vld [vmem:[#allocation5 + $0x10] sm:$0xff]
    %v45 = vld [vmem:[#allocation5 + $0x18] sm:$0xff]
    %v46 = vld [vmem:[%s2] sm:$0x1]
    %v48 = vlaneseq
    %v49 = vshrl.u32 %v48, 7
    %v50 = vsub.s32 0, %v49
    %v51 = vrot.slane %v46, %v50
    %vm53 = vcmask 261120
    %v55 = vsel %vm53, %v41, 0
    %57 = vmatprep.subr.mxu0 0.0
    %58 = vmatpush1.msra.mxu0 %v42
    %59 = vmatprep.subr.mxu0 0.0
    %60 = vmatpush1.msra.mxu0 %v43
    %61 = vmatprep.subr.mxu0 0.0
    %62 = vmatpush1.msra.mxu0 %v44
    %63 = vmatprep.subr.mxu0 0.0
    %64 = vmatpush1.msra.mxu0 %v45
    %65 = vmatprep.subr.mxu0 0.0
    %66 = vmatpush1.msra.mxu0 0.0
    %67 = vmatprep.subr.mxu0 0.0
    %68 = vmatpush1.msra.mxu0 0.0
    %69 = vmatprep.subr.mxu0 0.0
    %70 = vmatpush1.msra.mxu0 0.0
    %71 = vmatprep.subr.mxu0 0.0
    %72 = vmatpush1.msra.mxu0 0.0
    %73 = vmatprep.subr.mxu0 0.0
    %74 = vmatpush1.msra.mxu0 0.0
    %75 = vmatprep.subr.mxu0 0.0
    %76 = vmatpush1.msra.mxu0 0.0
    %77 = vmatprep.subr.mxu0 0.0
    %78 = vmatpush1.msra.mxu0 0.0
    %79 = vmatprep.subr.mxu0 0.0
    %80 = vmatpush1.msra.mxu0 0.0
    %81 = vmatprep.subr.mxu0 0.0
    %82 = vmatpush1.msra.mxu0 0.0
    %83 = vmatprep.subr.mxu0 0.0
    %84 = vmatpush1.msra.mxu0 0.0
    %85 = vmatprep.subr.mxu0 0.0
    %86 = vmatpush1.msra.mxu0 0.0
    %87 = vmatprep.subr.mxu0 0.0
    %88 = vmatpush1.msra.mxu0 0.0
    %89 = vmatprep.subr.mxu0 0.0
    %90 = vmatpush1.msra.mxu0 0.0
    %91 = vmatprep.subr.mxu0 0.0
    %92 = vmatpush1.msra.mxu0 0.0
    %93 = vmatprep.subr.mxu0 0.0
    %94 = vmatpush1.msra.mxu0 0.0
    %95 = vmatprep.subr.mxu0 0.0
    %96 = vmatpush1.msra.mxu0 0.0
    %97 = vmatprep.subr.mxu0 0.0
    %98 = vmatpush1.msra.mxu0 0.0
    %99 = vmatprep.subr.mxu0 0.0
    %100 = vmatpush1.msra.mxu0 0.0
    %101 = vmatprep.subr.mxu0 0.0
    %102 = vmatpush1.msra.mxu0 0.0
    %103 = vmatprep.subr.mxu0 0.0
    %104 = vmatpush1.msra.mxu0 0.0
    %105 = vmatprep.subr.mxu0 0.0
    %106 = vmatpush1.msra.mxu0 0.0
    %107 = vmatprep.subr.mxu0 0.0
    %108 = vmatpush1.msra.mxu0 0.0
    %109 = vmatprep.subr.mxu0 0.0
    %110 = vmatpush1.msra.mxu0 0.0
    %111 = vmatprep.subr.mxu0 0.0
    %112 = vmatpush1.msra.mxu0 0.0
    %113 = vmatprep.subr.mxu0 0.0
    %114 = vmatpush1.msra.mxu0 0.0
    %115 = vmatprep.subr.mxu0 0.0
    %116 = vmatpush1.msra.mxu0 0.0
    %117 = vmatprep.subr.mxu0 0.0
    %118 = vmatpush1.msra.mxu0 0.0
    %119 = vmatprep.subr.mxu0 0.0
    %120 = vmatpush1.msra.mxu0 0.0
    %121 = vmatprep.mubr.f32.mxu0 0.0
    %122 = vmatmul.mubr.f32.gmra.mrb[0].mxu0 %v55
    %v123 = vpop.f32.mrb[0].mxu0
    %v124 = vadd.f32 %v51, %v123
    %v125 = vpop.f32.mrb[0].mxu0
    %126 = vdwg.mxu0
    %v127 = vmax.f32 %v124, 0.0
    %v128 = vsub.f32 0.0, %v127
    %v129 = vmul.f32 %v128, 1.442695
    %v130 = vpow.pop %v129
    %vm131 = vcmask 392192
    %132 = vst.msk [vmem:[#allocation7] sm:$0xff] %vm131, %v130
    // Predicated region
    $region22: #{tpu_custom_call.1} parent=1 // pred_check
      _
    $region23: #{tpu_custom_call.1} parent=1 // pred_check_branch
      %134 = sbr.rel (0) target = $region25
    $region24: #{tpu_custom_call.1} parent=1 // pred_region
      %s136 = ssub.s32 128, 128
      %137 = vsyncadd [#allocation4], %s136
      %s139 = sshll.u32 [#allocation7], 4
      %s140 = int_to_ptr.vmem [resolvable:$true] %s139
      %142 = dma.vmem_to_hbm [thread:$0]  %s140, 128, %s3, [#allocation4]
    $region25: #{tpu_custom_call.1} parent=1 // pred_fallthru
      _
    // Predicated region
    $region26: #{tpu_custom_call.1} parent=1 // pred_check
      _
    $region27: #{tpu_custom_call.1} parent=1 // pred_check_branch
      %144 = sbr.rel (0) target = $region29
    $region28: #{tpu_custom_call.1} parent=1 // pred_region
      %145 = dma.done [#allocation4], 128
    $region29: #{tpu_custom_call.1} parent=1 // pred_fallthru
      _
    %146 = vsyncpa [#allocation3], 1
    %147 = vsyncpa [#allocation6], 1
    %148 = vsyncpa [#allocation4], 1

</llo_original>
